<compile_context>
chip_gen: v5e
topology: v5e:2x2
jax: 0.10.0
libtpu: 0.0.40
codegen_flags: <defaults>
</compile_context>

<pallas_src>
import functools
import math

import jax
import jax.numpy as jnp
from jax.experimental import pallas as pl
from jax.experimental.pallas import tpu as pltpu

_LANE = 128
_MAX_COLS = 32 * _LANE          # cap trailing dim at 4096 lanes
_SMALL_BYTES = 256 * 1024       # below this, skip the custom call entirely


def _identity_kernel(x_ref, o_ref):
    # Stream the current VMEM tile through unchanged.
    o_ref[...] = x_ref[...]


def _vmem_capacity_bytes() -> int:
    """Physical per-core VMEM, queried at trace time; conservative fallback."""
    try:
        info = pltpu.get_tpu_info()
        cap = int(getattr(info, "vmem_capacity_bytes", 0) or 0)
        if cap > 0:
            return cap
    except Exception:
        pass
    return 64 << 20  # v7x per-TC VMEM — the smallest across supported generations


def _pick_cols(n: int, last_dim: int) -> int:
    """Widest lane-friendly divisor of n to use as the trailing (lane) dim."""
    # Preferred: a multiple of 128 that divides n exactly (wide unmasked stores,
    # fat contiguous DMAs, zero padding / round trips).
    best = 0
    c = _LANE
    while c <= _MAX_COLS:
        if n % c == 0:
            best = c
        c *= 2
    if best:
        return best
    # n is not a multiple of 128: take the widest divisor of n <= 4096 (the block's
    # trailing dim equals the full array trailing dim, which is always legal).
    best = 1
    i = 1
    while i * i <= n:
        if n % i == 0:
            for d in (i, n // i):
                if best < d <= _MAX_COLS:
                    best = d
        i += 1
    if best > 1:
        return best
    # Last resort (e.g. a huge prime element count): the array's own trailing dim.
    return max(1, min(last_dim, n))


def _plan(shape, itemsize):
    """Pick (rows, cols) view, row-block size and an explicit scoped-VMEM limit."""
    n = math.prod(shape) if shape else 1
    cols = _pick_cols(n, shape[-1] if shape else 1)
    rows = n // cols

    # Sublane packing multiple for this dtype: f32 -> 8, bf16 -> 16, int8/fp8 -> 32.
    sub = 8 * max(1, 4 // itemsize)

    vmem_phys = _vmem_capacity_bytes()
    # ~4 MiB blocks on 64 MiB-VMEM parts (v7x), ~8 MiB on 128 MiB parts (v5e/v6e):
    # big enough that the ~0.35 us per-grid-step overhead is a few % of each step.
    target_block_bytes = min(8 << 20, max(4 << 20, vmem_phys // 16))
    # 2x-in + 2x-out double buffers plus compiler scratch must fit; raise the scoped
    # limit explicitly (v5e default is only 16 MiB) but stay well under physical.
    vmem_limit = int(max(32 << 20,
                         min(3 * vmem_phys // 4, 4 * target_block_bytes + (24 << 20))))

    row_bytes = max(1, cols * itemsize)
    rows_budget = max(1, target_block_bytes // row_bytes)

    if rows <= sub:
        block_rows = rows                       # full extent: always a legal block dim
    else:
        # Largest sublane-aligned block that fits the per-block VMEM budget.
        block_rows = max(sub, (rows_budget // sub) * sub)
        # Keep >= min_blocks grid steps so v7x's two TensorCores both stream.
        min_blocks = min(4, rows // sub)
        if min_blocks > 1 and pl.cdiv(rows, block_rows) < min_blocks:
            block_rows = max(sub, (pl.cdiv(rows, min_blocks) // sub) * sub)

    return rows, cols, block_rows, vmem_limit


def identity(x: jax.Array, *, donate: bool = False, force_pallas: bool = False) -> jax.Array:
    """y = x, preserving shape, dtype and values exactly.

    donate=True means the caller hands over x's buffer (jit donate_argnums), so the
    identity is a true no-op and we return x directly (zero HBM bytes moved).
    Otherwise a single streaming Pallas copy (2N bytes) materializes a fresh buffer.
    """
    if donate or x.size == 0:
        return x

    itemsize = jnp.dtype(x.dtype).itemsize
    nbytes = x.size * itemsize
    if nbytes < _SMALL_BYTES and not force_pallas:
        # Launch + pipeline-setup cost dominates for tiny tensors.
        return jnp.copy(x)

    orig_shape = x.shape
    rows, cols, block_rows, vmem_limit = _plan(orig_shape if x.ndim else (1,), itemsize)

    x2d = x.reshape(rows, cols)                 # pure reshape, no pad / extra copy
    grid = (pl.cdiv(rows, block_rows),)         # ragged last block is masked by Pallas

    y2d = pl.pallas_call(
        _identity_kernel,
        out_shape=jax.ShapeDtypeStruct((rows, cols), x2d.dtype),
        grid_spec=pltpu.PrefetchScalarGridSpec(
            num_scalar_prefetch=0,
            grid=grid,
            in_specs=[pl.BlockSpec((block_rows, cols), lambda i: (i, 0))],
            out_specs=pl.BlockSpec((block_rows, cols), lambda i: (i, 0)),
        ),
        # Pure-bandwidth hint for the XLA scheduler: 0 flops, read N + write N bytes.
        cost_estimate=pl.CostEstimate(
            flops=0, transcendentals=0, bytes_accessed=2 * nbytes
        ),
        compiler_params=pltpu.CompilerParams(
            # Row blocks are independent -> shard the grid across TensorCores (v7x).
            dimension_semantics=("parallel",),
            vmem_limit_bytes=vmem_limit,
        ),
    )(x2d)

    return y2d.reshape(orig_shape)


if __name__ == "__main__":
    key = jax.random.PRNGKey(0)
    x = jax.random.normal(key, (2, 4, 16, 16), dtype=jnp.float32)  # NCHW, as in the module

    # force_pallas=True so the demo exercises the Pallas copy path even though this
    # 8 KiB tensor would normally take the tiny-tensor short circuit.  In production,
    # pass donate=True together with jit donate_argnums to make identity a pure no-op.
    identity_fn = jax.jit(functools.partial(identity, force_pallas=True))
    y = jax.block_until_ready(identity_fn(x))

    assert y.shape == x.shape, (y.shape, x.shape)
    assert y.dtype == x.dtype, (y.dtype, x.dtype)
    assert bool(jnp.all(y == x)), "identity mismatch"

    print("KERNEL_OK")
</pallas_src>

<mosaic_0001>
module attributes {stable_mosaic.version = 11 : i64} {
  func.func @_identity_kernel(%arg0: i32, %arg1: memref<1x2048xf32, #tpu.memory_space<vmem>>, %arg2: memref<1x2048xf32, #tpu.memory_space<vmem>>) attributes {dimension_semantics = [#tpu.dimension_semantics<parallel>], iteration_bounds = array<i64: 1>, scalar_prefetch = 0 : i64, scratch_operands = 0 : i64, tpu.core_type = #tpu.core_type<tc>, window_params = [{transform_indices = @transform_0, window_bounds = array<i64: 1, 2048>}, {transform_indices = @transform_1, window_bounds = array<i64: 1, 2048>}]} {
    %c0 = arith.constant 0 : index
    %c0_0 = arith.constant 0 : index
    %0 = vector.load %arg1[%c0, %c0_0] : memref<1x2048xf32, #tpu.memory_space<vmem>>, vector<1x2048xf32>
    %c0_1 = arith.constant 0 : index
    %c0_2 = arith.constant 0 : index
    %1 = vector.load %arg2[%c0_1, %c0_2] : memref<1x2048xf32, #tpu.memory_space<vmem>>, vector<1x2048xf32>
    tpu.vector_store %arg2[%c0_1, %c0_2], %0 {strides = array<i32>} : memref<1x2048xf32, #tpu.memory_space<vmem>>, vector<1x2048xf32>,
    return
  }
  func.func @transform_0(%arg0: i32) -> (i32, i32) {
    %c0_i32 = arith.constant 0 : i32
    %c0_i32_0 = arith.constant 0 : i32
    return %arg0, %c0_i32 : i32, i32
  }
  func.func @transform_1(%arg0: i32) -> (i32, i32) {
    %c0_i32 = arith.constant 0 : i32
    %c0_i32_0 = arith.constant 0 : i32
    return %arg0, %c0_i32 : i32, i32
  }
}

</mosaic_0001>

<llo_original>
// kernel: identity.1
$region0: #{identity.1}
  #allocation0 [shape = 'u32[]', space=smem, size = 0x4, offset = 0x4, fixed_abs, tag = 'smem constant byte address 0x4 - core index']
  #allocation1 [shape = 'u32[72,128]{1,0:T(1,128)}', space=vmem, size = 0x9000, scoped, tag = 'internal scratch']
  %s0 = inlined_call_operand.vmem [shape: f32[1,2048], index: 0, kind: input, shape index: {}]
  %s1 = inlined_call_operand.vmem [shape: f32[1,2048], index: 1, kind: output, shape index: {}]
  %s2 = sld [smem:[#allocation0]]
  $region14: #{identity.1} parent=0
    _
  %s4 = ssub.s32 1, %s2
  %s5 = scalar_select 0, %s4, %s2
  // Predicated region
  $region2: #{identity.1} parent=0 // pred_check
    _
  $region3: #{identity.1} parent=0 // pred_check_branch
    %7 = sbr.rel (0) target = $region5
  $region4: #{identity.1} parent=0 // pred_region
    _
  $region5: #{identity.1} parent=0 // pred_fallthru
    _
  %v8 = vld [vmem:[%s0] sm:$0xff]
  %v9 = vld [vmem:[%s0 + $0x8] sm:$0xff]
  %10 = vst [vmem:[%s1] sm:$0xff] %v8
  %11 = vst [vmem:[%s1 + $0x8] sm:$0xff] %v9
  // Predicated region
  $region6: #{identity.1} parent=0 // pred_check
    _
  $region7: #{identity.1} parent=0 // pred_check_branch
    %13 = sbr.rel (0) target = $region9
  $region8: #{identity.1} parent=0 // pred_region
    _
  $region9: #{identity.1} parent=0 // pred_fallthru
    _
  // Predicated region
  $region10: #{identity.1} parent=0 // pred_check
    _
  $region11: #{identity.1} parent=0 // pred_check_branch
    %15 = sbr.rel (0) target = $region13
  $region12: #{identity.1} parent=0 // pred_region
    _
  $region13: #{identity.1} parent=0 // pred_fallthru
    _

</llo_original>
